<compile_context>
chip_gen: v7x
topology: tpu7x:2x2x1
jax: 0.10.0
libtpu: 0.0.40
codegen_flags: <defaults>
</compile_context>

<pallas_src>
import functools
import math

import jax
import jax.numpy as jnp
from jax.experimental import pallas as pl
from jax.experimental.pallas import tpu as pltpu


# ----------------------------------------------------------------------------
# helpers
# ----------------------------------------------------------------------------

def _mish(x):
    # mish(x) = x * tanh(softplus(x)) = x * (e^2 + 2e) / (e^2 + 2e + 2), e=exp(x)
    # One EUP exp + one approx EUP reciprocal; clamp keeps the large-x branch exact.
    e = jnp.exp(jnp.minimum(x, 20.0))
    num = e * (e + 2.0)
    t = num * pl.reciprocal(num + 2.0, approx=True)
    return jnp.where(x > 20.0, x, x * t)


def _pack_conv_weight(weight, stride):
    """PyTorch Conv1d weight (C_out, C_in, K) -> (ceil(K/stride)*stride*C_in, C_out)
    bf16, tap-major / c_in-minor, zero-padded to a whole number of tap groups.

    This matches an im2col operand whose lanes are [tap0 chans | tap1 chans | ...],
    which for stride>1 is exactly the stride-phase-packed layout built in the
    wrapper (stride consecutive time-steps packed along the channel axis)."""
    c_out, c_in, k_sz = weight.shape
    n_taps = -(-k_sz // stride) * stride
    w = jnp.transpose(weight, (2, 1, 0))                       # (K, C_in, C_out)
    if n_taps > k_sz:
        w = jnp.concatenate(
            [w, jnp.zeros((n_taps - k_sz, c_in, c_out), w.dtype)], axis=0)
    return w.reshape(n_taps * c_in, c_out).astype(jnp.bfloat16)


# ----------------------------------------------------------------------------
# fused Block kernel
# ----------------------------------------------------------------------------

def _block_kernel(x_ref, t_ref, wt_ref, w1_ref, w2_ref, vec_ref, *rest,
                  B, L1, K, pad, G1, C_out, up, eps=1e-5):
    if up:
        wtr_ref, out_ref, h1p_ref, h2p_ref = rest
    else:
        out_ref, h1p_ref = rest

    f32, bf16 = jnp.float32, jnp.bfloat16
    n = float(B * L1)

    # consolidated per-channel parameter rows (static ref slices: free)
    bt, b1 = vec_ref[0:1, :], vec_ref[1:2, :]
    g1, be1 = vec_ref[2:3, :], vec_ref[3:4, :]
    b2 = vec_ref[4:5, :]
    g2, be2 = vec_ref[5:6, :], vec_ref[6:7, :]

    # ---- time embedding: mish(t @ Wt + bt) -> (B, C_out) --------------------
    temb = _mish(jnp.dot(t_ref[...].astype(bf16), wt_ref[...],
                         preferred_element_type=f32) + bt)

    # ---- conv1 + Mish: ONE matmul, M = B*L1, contraction = G1*stride*C_in ---
    a1 = jnp.concatenate(
        [jnp.concatenate([x_ref[b, g:g + L1, :] for g in range(G1)], axis=-1)
         for b in range(B)], axis=0)                            # (B*L1, .) bf16
    h1 = _mish(jnp.dot(a1, w1_ref[...], preferred_element_type=f32) + b1)

    # ---- BatchNorm1 (training-mode batch stats, centered variance) ----------
    mean1 = jnp.sum(h1, axis=0, keepdims=True) / n
    d1 = h1 - mean1
    var1 = jnp.sum(d1 * d1, axis=0, keepdims=True) / n
    scale1 = g1 * jax.lax.rsqrt(var1 + eps)
    shift1 = be1 - mean1 * scale1

    # BN1 affine fused with the time-embedding add; write padded bf16 conv2
    # input. Only the pad boundary rows are zero-filled.
    h1p_ref[:, 0:pad, :] = jnp.zeros((B, pad, C_out), bf16)
    h1p_ref[:, pad + L1:pad + L1 + pad, :] = jnp.zeros((B, pad, C_out), bf16)
    for b in range(B):
        rows = h1[b * L1:(b + 1) * L1, :] * scale1 + (shift1 + temb[b:b + 1, :])
        h1p_ref[b, pad:pad + L1, :] = rows.astype(bf16)

    # ---- conv2 + Mish: ONE matmul, contraction = K*C_out --------------------
    a2 = jnp.concatenate(
        [jnp.concatenate([h1p_ref[b, k:k + L1, :] for k in range(K)], axis=-1)
         for b in range(B)], axis=0)                            # (B*L1, K*C_out)
    h2 = _mish(jnp.dot(a2, w2_ref[...], preferred_element_type=f32) + b2)

    # ---- BatchNorm2 ----------------------------------------------------------
    mean2 = jnp.sum(h2, axis=0, keepdims=True) / n
    d2 = h2 - mean2
    var2 = jnp.sum(d2 * d2, axis=0, keepdims=True) / n
    scale2 = g2 * jax.lax.rsqrt(var2 + eps)
    h2bn = h2 * scale2 + (be2 - mean2 * scale2)

    if not up:
        # transform = Identity: single lane-dense slab store
        out_ref[...] = h2bn.astype(out_ref.dtype)               # (B*L1, C_out)
    else:
        # transform = ConvTranspose1d(C, C, kernel=4, stride=2, padding=1) as a
        # polyphase (K=3) conv on the padded BN2 output:
        #   y[2j]   = x[j-1] @ W3 + x[j] @ W1 + b
        #   y[2j+1] = x[j]   @ W2 + x[j+1] @ W0 + b
        # Both phases come out of ONE matmul with lanes = [even | odd].
        btr = vec_ref[7:8, :]
        h2p_ref[:, 0:1, :] = jnp.zeros((B, 1, C_out), bf16)
        h2p_ref[:, 1 + L1:2 + L1, :] = jnp.zeros((B, 1, C_out), bf16)
        for b in range(B):
            h2p_ref[b, 1:1 + L1, :] = h2bn[b * L1:(b + 1) * L1, :].astype(bf16)
        a3 = jnp.concatenate(
            [jnp.concatenate([h2p_ref[b, k:k + L1, :] for k in range(3)], axis=-1)
             for b in range(B)], axis=0)                        # (B*L1, 3*C_out)
        y = jnp.dot(a3, wtr_ref[...], preferred_element_type=f32)
        out_ref[...] = (y + jnp.concatenate([btr, btr], axis=-1)).astype(out_ref.dtype)


# ----------------------------------------------------------------------------
# parameters (PyTorch-style init) + one-time packing
# ----------------------------------------------------------------------------

def init_block_params(key, in_ch, out_ch, kernel_size, time_emb_dim, up):
    keys = iter(jax.random.split(key, 16))

    def uni(shape, bound):
        return jax.random.uniform(next(keys), shape, jnp.float32, -bound, bound)

    p = {}
    b = 1.0 / math.sqrt(time_emb_dim)
    p["time_w"], p["time_b"] = uni((out_ch, time_emb_dim), b), uni((out_ch,), b)
    c1_in = 2 * in_ch if up else in_ch
    b = 1.0 / math.sqrt(c1_in * kernel_size)
    p["conv1_w"], p["conv1_b"] = uni((out_ch, c1_in, kernel_size), b), uni((out_ch,), b)
    b = 1.0 / math.sqrt(out_ch * kernel_size)
    p["conv2_w"], p["conv2_b"] = uni((out_ch, out_ch, kernel_size), b), uni((out_ch,), b)
    p["bn1_g"], p["bn1_b"] = jnp.ones((out_ch,), jnp.float32), jnp.zeros((out_ch,), jnp.float32)
    p["bn2_g"], p["bn2_b"] = jnp.ones((out_ch,), jnp.float32), jnp.zeros((out_ch,), jnp.float32)
    if up:
        b = 1.0 / math.sqrt(out_ch * 4)
        p["tr_w"], p["tr_b"] = uni((out_ch, out_ch, 4), b), uni((out_ch,), b)
    return p


def pack_block_params(p, up):
    """One-time weight packing (done at init, NOT per forward)."""
    stride = 1 if up else 2
    out_ch = p["conv1_b"].shape[0]
    btr = p["tr_b"] if up else jnp.zeros((out_ch,), jnp.float32)
    packed = {
        "wt": p["time_w"].T.astype(jnp.bfloat16),               # (D, C_out)
        "w1": _pack_conv_weight(p["conv1_w"], stride),          # (G1*stride*C_in, C_out)
        "w2": _pack_conv_weight(p["conv2_w"], 1),               # (K*C_out, C_out)
        # all per-channel rows in one operand: bt, b1, g1, be1, b2, g2, be2, btr
        "vec": jnp.stack([p["time_b"], p["conv1_b"], p["bn1_g"], p["bn1_b"],
                          p["conv2_b"], p["bn2_g"], p["bn2_b"], btr]
                         ).astype(jnp.float32),                  # (8, C_out)
    }
    if up:
        W = p["tr_w"]                                            # (C_in, C_out, 4)
        z = jnp.zeros((out_ch, out_ch), W.dtype)
        # block rows multiply [x[j-1] | x[j] | x[j+1]]; block cols = [even | odd]
        packed["wtr"] = jnp.concatenate([
            jnp.concatenate([W[:, :, 3], z], axis=1),
            jnp.concatenate([W[:, :, 1], W[:, :, 2]], axis=1),
            jnp.concatenate([z, W[:, :, 0]], axis=1),
        ], axis=0).astype(jnp.bfloat16)                          # (3C, 2C)
    return packed


# ----------------------------------------------------------------------------
# Block forward (single fused pallas_call)
# ----------------------------------------------------------------------------

def block_forward(packed, x_ncl, t, *, kernel_size, up):
    """x_ncl: (B, C_in, L) [C_in = 2*in_ch for up blocks]; t: (B, time_emb_dim)."""
    B, c_in_eff, L = x_ncl.shape
    K = kernel_size
    pad = K // 2
    stride = 1 if up else 2
    L1 = (L + 2 * pad - K) // stride + 1
    G1 = -(-K // stride)
    C_out = packed["vec"].shape[-1]

    # Wrapper glue (fused by XLA into a single producer): NCL -> NLC, cast to
    # bf16 (it is only an MXU operand), pad the time axis, and pack `stride`
    # consecutive steps along the lane axis so every kernel load is dense and
    # stride-1 / lane-dense.
    x = jnp.transpose(x_ncl, (0, 2, 1)).astype(jnp.bfloat16)     # (B, L, C_in)
    rows = max(-(-(L + 2 * pad) // stride), L1 + G1 - 1)
    x = jnp.pad(x, ((0, 0), (pad, rows * stride - L - pad), (0, 0)))
    x = x.reshape(B, rows, stride * c_in_eff)

    inputs = [x, t.astype(jnp.float32), packed["wt"], packed["w1"],
              packed["w2"], packed["vec"]]
    scratch = [pltpu.VMEM((B, L1 + 2 * pad, C_out), jnp.bfloat16)]   # padded conv2 input
    if up:
        inputs.append(packed["wtr"])
        scratch.append(pltpu.VMEM((B, L1 + 2, C_out), jnp.bfloat16))  # padded transform input
        out_shape = jax.ShapeDtypeStruct((B * L1, 2 * C_out), jnp.float32)
    else:
        out_shape = jax.ShapeDtypeStruct((B * L1, C_out), jnp.float32)

    vmem = pl.BlockSpec(memory_space=pltpu.MemorySpace.VMEM)
    out = pl.pallas_call(
        functools.partial(_block_kernel, B=B, L1=L1, K=K, pad=pad, G1=G1,
                          C_out=C_out, up=up),
        in_specs=[vmem] * len(inputs),
        out_specs=vmem,
        out_shape=out_shape,
        scratch_shapes=scratch,
    )(*inputs)

    if up:
        # lanes are [even phase | odd phase]: de-interleave with free reshapes
        # + one transpose back to PyTorch NCL layout.
        y = out.reshape(B, L1, 2, C_out)
        return jnp.transpose(y, (0, 3, 1, 2)).reshape(B, C_out, 2 * L1)
    return jnp.transpose(out.reshape(B, L1, C_out), (0, 2, 1))   # (B, C_out, L1)


# ----------------------------------------------------------------------------
# Demo
# ----------------------------------------------------------------------------

if __name__ == "__main__":
    KERNEL_SIZE = 3
    TIME_EMB_DIM = 32
    BATCH = 2
    L = 16

    key = jax.random.PRNGKey(0)
    k_pd, k_pu, k_x, k_t, k_xu = jax.random.split(key, 5)

    t = jax.random.normal(k_t, (BATCH, TIME_EMB_DIM), jnp.float32)

    # --- down block: Block(in_ch=32, out_ch=64, k=3, time_emb_dim=32, up=False)
    IN_CH, OUT_CH = 32, 64
    p_down = init_block_params(k_pd, IN_CH, OUT_CH, KERNEL_SIZE, TIME_EMB_DIM, up=False)
    packed_down = pack_block_params(p_down, up=False)
    x_down = jax.random.normal(k_x, (BATCH, IN_CH, L), jnp.float32)
    fwd_down = jax.jit(functools.partial(block_forward, kernel_size=KERNEL_SIZE, up=False))
    y_down = jax.block_until_ready(fwd_down(packed_down, x_down, t))
    assert y_down.shape == (BATCH, OUT_CH, L // 2), y_down.shape

    # --- up block: Block(in_ch=64, out_ch=32, k=3, time_emb_dim=32, up=True)
    #     (its conv1 expects 2*in_ch channels from the skip concatenation)
    UP_IN, UP_OUT = 64, 32
    p_up = init_block_params(k_pu, UP_IN, UP_OUT, KERNEL_SIZE, TIME_EMB_DIM, up=True)
    packed_up = pack_block_params(p_up, up=True)
    x_up = jax.random.normal(k_xu, (BATCH, 2 * UP_IN, L // 2), jnp.float32)
    fwd_up = jax.jit(functools.partial(block_forward, kernel_size=KERNEL_SIZE, up=True))
    y_up = jax.block_until_ready(fwd_up(packed_up, x_up, t))
    assert y_up.shape == (BATCH, UP_OUT, L), y_up.shape

    assert bool(jnp.all(jnp.isfinite(y_down))) and bool(jnp.all(jnp.isfinite(y_up)))
    # TODO(synk): BatchNorm running-stat (eval-mode) buffers are not modeled;
    # training-mode batch statistics are used, matching nn.BatchNorm1d.train().
    print("KERNEL_OK")
</pallas_src>

<mosaic_0001>
module attributes {stable_mosaic.version = 11 : i64} {
  func.func @_block_kernel(%arg0: memref<2x9x64xbf16, #tpu.memory_space<vmem>>, %arg1: memref<2x32xf32, #tpu.memory_space<vmem>>, %arg2: memref<32x64xbf16, #tpu.memory_space<vmem>>, %arg3: memref<128x64xbf16, #tpu.memory_space<vmem>>, %arg4: memref<192x64xbf16, #tpu.memory_space<vmem>>, %arg5: memref<8x64xf32, #tpu.memory_space<vmem>>, %arg6: memref<16x64xf32, #tpu.memory_space<vmem>>, %arg7: memref<2x10x64xbf16, #tpu.memory_space<vmem>>) attributes {dimension_semantics = [], scalar_prefetch = 0 : i64, scratch_operands = 1 : i64, tpu.core_type = #tpu.core_type<tc>} {
    %c0 = arith.constant 0 : index
    %c0_0 = arith.constant 0 : index
    %0 = vector.load %arg5[%c0, %c0_0] : memref<8x64xf32, #tpu.memory_space<vmem>>, vector<1x64xf32>
    %c1 = arith.constant 1 : index
    %c0_1 = arith.constant 0 : index
    %1 = vector.load %arg5[%c1, %c0_1] : memref<8x64xf32, #tpu.memory_space<vmem>>, vector<1x64xf32>
    %c2 = arith.constant 2 : index
    %c0_2 = arith.constant 0 : index
    %2 = vector.load %arg5[%c2, %c0_2] : memref<8x64xf32, #tpu.memory_space<vmem>>, vector<1x64xf32>
    %c3 = arith.constant 3 : index
    %c0_3 = arith.constant 0 : index
    %3 = vector.load %arg5[%c3, %c0_3] : memref<8x64xf32, #tpu.memory_space<vmem>>, vector<1x64xf32>
    %c4 = arith.constant 4 : index
    %c0_4 = arith.constant 0 : index
    %4 = vector.load %arg5[%c4, %c0_4] : memref<8x64xf32, #tpu.memory_space<vmem>>, vector<1x64xf32>
    %c5 = arith.constant 5 : index
    %c0_5 = arith.constant 0 : index
    %5 = vector.load %arg5[%c5, %c0_5] : memref<8x64xf32, #tpu.memory_space<vmem>>, vector<1x64xf32>
    %c6 = arith.constant 6 : index
    %c0_6 = arith.constant 0 : index
    %6 = vector.load %arg5[%c6, %c0_6] : memref<8x64xf32, #tpu.memory_space<vmem>>, vector<1x64xf32>
    %c0_7 = arith.constant 0 : index
    %c0_8 = arith.constant 0 : index
    %7 = vector.load %arg1[%c0_7, %c0_8] : memref<2x32xf32, #tpu.memory_space<vmem>>, vector<2x32xf32>
    %8 = arith.truncf %7 : vector<2x32xf32> to vector<2x32xbf16>
    %c0_9 = arith.constant 0 : index
    %c0_10 = arith.constant 0 : index
    %9 = vector.load %arg2[%c0_9, %c0_10] : memref<32x64xbf16, #tpu.memory_space<vmem>>, vector<32x64xbf16>
    %cst = arith.constant dense<0.000000e+00> : vector<2x64xf32>
    %10 = tpu.matmul %8, %9, %cst {dimension_numbers = #tpu.dot_dimension_numbers<[1], [0], [0], [1], [0, 0, 1, 1], [], []>} : vector<2x32xbf16>, vector<32x64xbf16>, vector<2x64xf32> -> vector<2x64xf32>
    %11 = vector.broadcast %0 : vector<1x64xf32> to vector<2x64xf32>
    %12 = arith.addf %10, %11 : vector<2x64xf32>
    %cst_11 = arith.constant 2.000000e+01 : f32
    %13 = vector.broadcast %cst_11 : f32 to vector<2x64xf32>
    %14 = arith.minimumf %12, %13 : vector<2x64xf32>
    %15 = math.exp %14 : vector<2x64xf32>
    %cst_12 = arith.constant 2.000000e+00 : f32
    %16 = vector.broadcast %cst_12 : f32 to vector<2x64xf32>
    %17 = arith.addf %15, %16 : vector<2x64xf32>
    %18 = arith.mulf %15, %17 : vector<2x64xf32>
    %cst_13 = arith.constant 2.000000e+00 : f32
    %19 = vector.broadcast %cst_13 : f32 to vector<2x64xf32>
    %20 = arith.addf %18, %19 : vector<2x64xf32>
    %21 = tpu.reciprocal %20 {approx = true} : vector<2x64xf32> -> vector<2x64xf32>
    %22 = arith.mulf %18, %21 : vector<2x64xf32>
    %cst_14 = arith.constant 2.000000e+01 : f32
    %23 = vector.broadcast %cst_14 : f32 to vector<2x64xf32>
    %24 = arith.cmpf ogt, %12, %23 : vector<2x64xf32>
    %25 = arith.mulf %12, %22 : vector<2x64xf32>
    %26 = arith.select %24, %12, %25 : vector<2x64xi1>, vector<2x64xf32>
    %c0_15 = arith.constant 0 : index
    %c0_16 = arith.constant 0 : index
    %c0_17 = arith.constant 0 : index
    %27 = vector.load %arg0[%c0_15, %c0_16, %c0_17] : memref<2x9x64xbf16, #tpu.memory_space<vmem>>, vector<1x8x64xbf16>
    %28 = vector.shape_cast %27 : vector<1x8x64xbf16> to vector<8x64xbf16>
    %c0_18 = arith.constant 0 : index
    %c1_19 = arith.constant 1 : index
    %c0_20 = arith.constant 0 : index
    %29 = vector.load %arg0[%c0_18, %c1_19, %c0_20] : memref<2x9x64xbf16, #tpu.memory_space<vmem>>, vector<1x8x64xbf16>
    %30 = vector.shape_cast %29 : vector<1x8x64xbf16> to vector<8x64xbf16>
    %31 = tpu.concatenate %28, %30 in 1 : vector<8x64xbf16>, vector<8x64xbf16> -> vector<8x128xbf16>
    %c1_21 = arith.constant 1 : index
    %c0_22 = arith.constant 0 : index
    %c0_23 = arith.constant 0 : index
    %32 = vector.load %arg0[%c1_21, %c0_22, %c0_23] : memref<2x9x64xbf16, #tpu.memory_space<vmem>>, vector<1x8x64xbf16>
    %33 = vector.shape_cast %32 : vector<1x8x64xbf16> to vector<8x64xbf16>
    %c1_24 = arith.constant 1 : index
    %c1_25 = arith.constant 1 : index
    %c0_26 = arith.constant 0 : index
    %34 = vector.load %arg0[%c1_24, %c1_25, %c0_26] : memref<2x9x64xbf16, #tpu.memory_space<vmem>>, vector<1x8x64xbf16>
    %35 = vector.shape_cast %34 : vector<1x8x64xbf16> to vector<8x64xbf16>
    %36 = tpu.concatenate %33, %35 in 1 : vector<8x64xbf16>, vector<8x64xbf16> -> vector<8x128xbf16>
    %37 = tpu.concatenate %31, %36 in 0 : vector<8x128xbf16>, vector<8x128xbf16> -> vector<16x128xbf16>
    %c0_27 = arith.constant 0 : index
    %c0_28 = arith.constant 0 : index
    %38 = vector.load %arg3[%c0_27, %c0_28] : memref<128x64xbf16, #tpu.memory_space<vmem>>, vector<128x64xbf16>
    %cst_29 = arith.constant dense<0.000000e+00> : vector<16x64xf32>
    %39 = tpu.matmul %37, %38, %cst_29 {dimension_numbers = #tpu.dot_dimension_numbers<[1], [0], [0], [1], [0, 0, 1, 1], [], []>} : vector<16x128xbf16>, vector<128x64xbf16>, vector<16x64xf32> -> vector<16x64xf32>
    %40 = vector.broadcast %1 : vector<1x64xf32> to vector<16x64xf32>
    %41 = arith.addf %39, %40 : vector<16x64xf32>
    %cst_30 = arith.constant 2.000000e+01 : f32
    %42 = vector.broadcast %cst_30 : f32 to vector<16x64xf32>
    %43 = arith.minimumf %41, %42 : vector<16x64xf32>
    %44 = math.exp %43 : vector<16x64xf32>
    %cst_31 = arith.constant 2.000000e+00 : f32
    %45 = vector.broadcast %cst_31 : f32 to vector<16x64xf32>
    %46 = arith.addf %44, %45 : vector<16x64xf32>
    %47 = arith.mulf %44, %46 : vector<16x64xf32>
    %cst_32 = arith.constant 2.000000e+00 : f32
    %48 = vector.broadcast %cst_32 : f32 to vector<16x64xf32>
    %49 = arith.addf %47, %48 : vector<16x64xf32>
    %50 = tpu.reciprocal %49 {approx = true} : vector<16x64xf32> -> vector<16x64xf32>
    %51 = arith.mulf %47, %50 : vector<16x64xf32>
    %cst_33 = arith.constant 2.000000e+01 : f32
    %52 = vector.broadcast %cst_33 : f32 to vector<16x64xf32>
    %53 = arith.cmpf ogt, %41, %52 : vector<16x64xf32>
    %54 = arith.mulf %41, %51 : vector<16x64xf32>
    %55 = arith.select %53, %41, %54 : vector<16x64xi1>, vector<16x64xf32>
    %cst_34 = arith.constant dense<0.000000e+00> : vector<64xf32>
    %56 = vector.multi_reduction <add>, %55, %cst_34 [0] : vector<16x64xf32> to vector<64xf32>
    %57 = vector.shape_cast %56 : vector<64xf32> to vector<1x64xf32>
    %cst_35 = arith.constant 1.600000e+01 : f32
    %58 = vector.broadcast %cst_35 : f32 to vector<1x64xf32>
    %59 = arith.divf %57, %58 : vector<1x64xf32>
    %60 = vector.broadcast %59 : vector<1x64xf32> to vector<16x64xf32>
    %61 = arith.subf %55, %60 : vector<16x64xf32>
    %62 = arith.mulf %61, %61 : vector<16x64xf32>
    %cst_36 = arith.constant dense<0.000000e+00> : vector<64xf32>
    %63 = vector.multi_reduction <add>, %62, %cst_36 [0] : vector<16x64xf32> to vector<64xf32>
    %64 = vector.shape_cast %63 : vector<64xf32> to vector<1x64xf32>
    %cst_37 = arith.constant 1.600000e+01 : f32
    %65 = vector.broadcast %cst_37 : f32 to vector<1x64xf32>
    %66 = arith.divf %64, %65 : vector<1x64xf32>
    %cst_38 = arith.constant 9.99999974E-6 : f32
    %67 = vector.broadcast %cst_38 : f32 to vector<1x64xf32>
    %68 = arith.addf %66, %67 : vector<1x64xf32>
    %69 = math.rsqrt %68 : vector<1x64xf32>
    %70 = arith.mulf %2, %69 : vector<1x64xf32>
    %71 = arith.mulf %59, %70 : vector<1x64xf32>
    %72 = arith.subf %3, %71 : vector<1x64xf32>
    %cst_39 = arith.constant 0.000000e+00 : bf16
    %73 = vector.broadcast %cst_39 : bf16 to vector<2x1x64xbf16>
    %c0_40 = arith.constant 0 : index
    %c0_41 = arith.constant 0 : index
    %c0_42 = arith.constant 0 : index
    %74 = vector.load %arg7[%c0_40, %c0_41, %c0_42] : memref<2x10x64xbf16, #tpu.memory_space<vmem>>, vector<2x1x64xbf16>
    tpu.vector_store %arg7[%c0_40, %c0_41, %c0_42], %73 {strides = array<i32>} : memref<2x10x64xbf16, #tpu.memory_space<vmem>>, vector<2x1x64xbf16>,
    %cst_43 = arith.constant 0.000000e+00 : bf16
    %75 = vector.broadcast %cst_43 : bf16 to vector<2x1x64xbf16>
    %c0_44 = arith.constant 0 : index
    %c9 = arith.constant 9 : index
    %c0_45 = arith.constant 0 : index
    %76 = vector.load %arg7[%c0_44, %c9, %c0_45] : memref<2x10x64xbf16, #tpu.memory_space<vmem>>, vector<2x1x64xbf16>
    tpu.vector_store %arg7[%c0_44, %c9, %c0_45], %75 {strides = array<i32>} : memref<2x10x64xbf16, #tpu.memory_space<vmem>>, vector<2x1x64xbf16>,
    %77 = vector.extract_strided_slice %55 {offsets = [0, 0], sizes = [8, 64], strides = [1, 1]} : vector<16x64xf32> to vector<8x64xf32>
    %78 = vector.broadcast %70 : vector<1x64xf32> to vector<8x64xf32>
    %79 = arith.mulf %77, %78 : vector<8x64xf32>
    %80 = vector.extract_strided_slice %26 {offsets = [0, 0], sizes = [1, 64], strides = [1, 1]} : vector<2x64xf32> to vector<1x64xf32>
    %81 = arith.addf %72, %80 : vector<1x64xf32>
    %82 = vector.broadcast %81 : vector<1x64xf32> to vector<8x64xf32>
    %83 = arith.addf %79, %82 : vector<8x64xf32>
    %84 = arith.truncf %83 : vector<8x64xf32> to vector<8x64xbf16>
    %c0_46 = arith.constant 0 : index
    %c1_47 = arith.constant 1 : index
    %c0_48 = arith.constant 0 : index
    %85 = vector.load %arg7[%c0_46, %c1_47, %c0_48] : memref<2x10x64xbf16, #tpu.memory_space<vmem>>, vector<1x8x64xbf16>
    %86 = vector.shape_cast %85 : vector<1x8x64xbf16> to vector<8x64xbf16>
    %87 = vector.shape_cast %84 : vector<8x64xbf16> to vector<1x8x64xbf16>
    tpu.vector_store %arg7[%c0_46, %c1_47, %c0_48], %87 {strides = array<i32>} : memref<2x10x64xbf16, #tpu.memory_space<vmem>>, vector<1x8x64xbf16>,
    %88 = vector.extract_strided_slice %55 {offsets = [8, 0], sizes = [8, 64], strides = [1, 1]} : vector<16x64xf32> to vector<8x64xf32>
    %89 = vector.broadcast %70 : vector<1x64xf32> to vector<8x64xf32>
    %90 = arith.mulf %88, %89 : vector<8x64xf32>
    %91 = vector.extract_strided_slice %26 {offsets = [1, 0], sizes = [1, 64], strides = [1, 1]} : vector<2x64xf32> to vector<1x64xf32>
    %92 = arith.addf %72, %91 : vector<1x64xf32>
    %93 = vector.broadcast %92 : vector<1x64xf32> to vector<8x64xf32>
    %94 = arith.addf %90, %93 : vector<8x64xf32>
    %95 = arith.truncf %94 : vector<8x64xf32> to vector<8x64xbf16>
    %c1_49 = arith.constant 1 : index
    %c1_50 = arith.constant 1 : index
    %c0_51 = arith.constant 0 : index
    %96 = vector.load %arg7[%c1_49, %c1_50, %c0_51] : memref<2x10x64xbf16, #tpu.memory_space<vmem>>, vector<1x8x64xbf16>
    %97 = vector.shape_cast %96 : vector<1x8x64xbf16> to vector<8x64xbf16>
    %98 = vector.shape_cast %95 : vector<8x64xbf16> to vector<1x8x64xbf16>
    tpu.vector_store %arg7[%c1_49, %c1_50, %c0_51], %98 {strides = array<i32>} : memref<2x10x64xbf16, #tpu.memory_space<vmem>>, vector<1x8x64xbf16>,
    %c0_52 = arith.constant 0 : index
    %c0_53 = arith.constant 0 : index
    %c0_54 = arith.constant 0 : index
    %99 = vector.load %arg7[%c0_52, %c0_53, %c0_54] : memref<2x10x64xbf16, #tpu.memory_space<vmem>>, vector<1x8x64xbf16>
    %100 = vector.shape_cast %99 : vector<1x8x64xbf16> to vector<8x64xbf16>
    %c0_55 = arith.constant 0 : index
    %c1_56 = arith.constant 1 : index
    %c0_57 = arith.constant 0 : index
    %101 = vector.load %arg7[%c0_55, %c1_56, %c0_57] : memref<2x10x64xbf16, #tpu.memory_space<vmem>>, vector<1x8x64xbf16>
    %102 = vector.shape_cast %101 : vector<1x8x64xbf16> to vector<8x64xbf16>
    %c0_58 = arith.constant 0 : index
    %c2_59 = arith.constant 2 : index
    %c0_60 = arith.constant 0 : index
    %103 = vector.load %arg7[%c0_58, %c2_59, %c0_60] : memref<2x10x64xbf16, #tpu.memory_space<vmem>>, vector<1x8x64xbf16>
    %104 = vector.shape_cast %103 : vector<1x8x64xbf16> to vector<8x64xbf16>
    %105 = tpu.concatenate %100, %102, %104 in 1 : vector<8x64xbf16>, vector<8x64xbf16>, vector<8x64xbf16> -> vector<8x192xbf16>
    %c1_61 = arith.constant 1 : index
    %c0_62 = arith.constant 0 : index
    %c0_63 = arith.constant 0 : index
    %106 = vector.load %arg7[%c1_61, %c0_62, %c0_63] : memref<2x10x64xbf16, #tpu.memory_space<vmem>>, vector<1x8x64xbf16>
    %107 = vector.shape_cast %106 : vector<1x8x64xbf16> to vector<8x64xbf16>
    %c1_64 = arith.constant 1 : index
    %c1_65 = arith.constant 1 : index
    %c0_66 = arith.constant 0 : index
    %108 = vector.load %arg7[%c1_64, %c1_65, %c0_66] : memref<2x10x64xbf16, #tpu.memory_space<vmem>>, vector<1x8x64xbf16>
    %109 = vector.shape_cast %108 : vector<1x8x64xbf16> to vector<8x64xbf16>
    %c1_67 = arith.constant 1 : index
    %c2_68 = arith.constant 2 : index
    %c0_69 = arith.constant 0 : index
    %110 = vector.load %arg7[%c1_67, %c2_68, %c0_69] : memref<2x10x64xbf16, #tpu.memory_space<vmem>>, vector<1x8x64xbf16>
    %111 = vector.shape_cast %110 : vector<1x8x64xbf16> to vector<8x64xbf16>
    %112 = tpu.concatenate %107, %109, %111 in 1 : vector<8x64xbf16>, vector<8x64xbf16>, vector<8x64xbf16> -> vector<8x192xbf16>
    %113 = tpu.concatenate %105, %112 in 0 : vector<8x192xbf16>, vector<8x192xbf16> -> vector<16x192xbf16>
    %c0_70 = arith.constant 0 : index
    %c0_71 = arith.constant 0 : index
    %114 = vector.load %arg4[%c0_70, %c0_71] : memref<192x64xbf16, #tpu.memory_space<vmem>>, vector<192x64xbf16>
    %cst_72 = arith.constant dense<0.000000e+00> : vector<16x64xf32>
    %115 = tpu.matmul %113, %114, %cst_72 {dimension_numbers = #tpu.dot_dimension_numbers<[1], [0], [0], [1], [0, 0, 1, 1], [], []>} : vector<16x192xbf16>, vector<192x64xbf16>, vector<16x64xf32> -> vector<16x64xf32>
    %116 = vector.broadcast %4 : vector<1x64xf32> to vector<16x64xf32>
    %117 = arith.addf %115, %116 : vector<16x64xf32>
    %cst_73 = arith.constant 2.000000e+01 : f32
    %118 = vector.broadcast %cst_73 : f32 to vector<16x64xf32>
    %119 = arith.minimumf %117, %118 : vector<16x64xf32>
    %120 = math.exp %119 : vector<16x64xf32>
    %cst_74 = arith.constant 2.000000e+00 : f32
    %121 = vector.broadcast %cst_74 : f32 to vector<16x64xf32>
    %122 = arith.addf %120, %121 : vector<16x64xf32>
    %123 = arith.mulf %120, %122 : vector<16x64xf32>
    %cst_75 = arith.constant 2.000000e+00 : f32
    %124 = vector.broadcast %cst_75 : f32 to vector<16x64xf32>
    %125 = arith.addf %123, %124 : vector<16x64xf32>
    %126 = tpu.reciprocal %125 {approx = true} : vector<16x64xf32> -> vector<16x64xf32>
    %127 = arith.mulf %123, %126 : vector<16x64xf32>
    %cst_76 = arith.constant 2.000000e+01 : f32
    %128 = vector.broadcast %cst_76 : f32 to vector<16x64xf32>
    %129 = arith.cmpf ogt, %117, %128 : vector<16x64xf32>
    %130 = arith.mulf %117, %127 : vector<16x64xf32>
    %131 = arith.select %129, %117, %130 : vector<16x64xi1>, vector<16x64xf32>
    %cst_77 = arith.constant dense<0.000000e+00> : vector<64xf32>
    %132 = vector.multi_reduction <add>, %131, %cst_77 [0] : vector<16x64xf32> to vector<64xf32>
    %133 = vector.shape_cast %132 : vector<64xf32> to vector<1x64xf32>
    %cst_78 = arith.constant 1.600000e+01 : f32
    %134 = vector.broadcast %cst_78 : f32 to vector<1x64xf32>
    %135 = arith.divf %133, %134 : vector<1x64xf32>
    %136 = vector.broadcast %135 : vector<1x64xf32> to vector<16x64xf32>
    %137 = arith.subf %131, %136 : vector<16x64xf32>
    %138 = arith.mulf %137, %137 : vector<16x64xf32>
    %cst_79 = arith.constant dense<0.000000e+00> : vector<64xf32>
    %139 = vector.multi_reduction <add>, %138, %cst_79 [0] : vector<16x64xf32> to vector<64xf32>
    %140 = vector.shape_cast %139 : vector<64xf32> to vector<1x64xf32>
    %cst_80 = arith.constant 1.600000e+01 : f32
    %141 = vector.broadcast %cst_80 : f32 to vector<1x64xf32>
    %142 = arith.divf %140, %141 : vector<1x64xf32>
    %cst_81 = arith.constant 9.99999974E-6 : f32
    %143 = vector.broadcast %cst_81 : f32 to vector<1x64xf32>
    %144 = arith.addf %142, %143 : vector<1x64xf32>
    %145 = math.rsqrt %144 : vector<1x64xf32>
    %146 = arith.mulf %5, %145 : vector<1x64xf32>
    %147 = vector.broadcast %146 : vector<1x64xf32> to vector<16x64xf32>
    %148 = arith.mulf %131, %147 : vector<16x64xf32>
    %149 = arith.mulf %135, %146 : vector<1x64xf32>
    %150 = arith.subf %6, %149 : vector<1x64xf32>
    %151 = vector.broadcast %150 : vector<1x64xf32> to vector<16x64xf32>
    %152 = arith.addf %148, %151 : vector<16x64xf32>
    %c0_82 = arith.constant 0 : index
    %c0_83 = arith.constant 0 : index
    %153 = vector.load %arg6[%c0_82, %c0_83] : memref<16x64xf32, #tpu.memory_space<vmem>>, vector<16x64xf32>
    tpu.vector_store %arg6[%c0_82, %c0_83], %152 {strides = array<i32>} : memref<16x64xf32, #tpu.memory_space<vmem>>, vector<16x64xf32>,
    return
  }
}

</mosaic_0001>

<llo_original>
// kernel: block_forward.1
$region0: #{block_forward.1}
  #allocation0 [shape = 'u32[]', space=smem, size = 0x4, offset = 0x4, fixed_abs, tag = 'smem constant byte address 0x4 - core index']
  #allocation1 [shape = 'u32[144,128]{1,0:T(1,128)}', space=vmem, size = 0x12000, scoped, tag = 'internal scratch']
  #allocation2 [shape = 'bf16[2,10,64]{2,1,0:T(8,128)(2,1)}', space=vmem, size = 0x2000, scoped, tag = 'scratch operand']
  %s0 = inlined_call_operand.vmem [shape: bf16[2,9,64], index: 0, kind: input, shape index: {}]
  %s1 = inlined_call_operand.vmem [shape: f32[2,32], index: 1, kind: input, shape index: {}]
  %s2 = inlined_call_operand.vmem [shape: bf16[32,64], index: 2, kind: input, shape index: {}]
  %s3 = inlined_call_operand.vmem [shape: bf16[128,64], index: 3, kind: input, shape index: {}]
  %s4 = inlined_call_operand.vmem [shape: bf16[192,64], index: 4, kind: input, shape index: {}]
  %s5 = inlined_call_operand.vmem [shape: f32[8,64], index: 5, kind: input, shape index: {}]
  %s6 = inlined_call_operand.hbm [shape: f32[16,64], index: 6, kind: output, shape index: {}]
  %s7 = sld [smem:[#allocation0]]
  $region34: #{block_forward.1} parent=0
    _
  %s9 = ssub.s32 1, %s7
  %s10 = scalar_select 0, %s9, %s7
  $region1: #{block_forward.1} parent=0
    #allocation3 [shape = 'u8[8192]{0}', space=vmem, size = 0x2000, scoped, tag = 'output window, operand 0, single buffered']
    #allocation4 [shape = 's32[1]{0}', space=sflag, size = 0x4, scoped, tag = 'scoped memory for block_forward.1']
    %11 = vsyncpa [#allocation4], 0
    // Predicated region
    $region2: #{block_forward.1} parent=1 // pred_check
      _
    $region3: #{block_forward.1} parent=1 // pred_check_branch
      %13 = sbr.rel (0) target = $region5
    $region4: #{block_forward.1} parent=1 // pred_region
      _
    $region5: #{block_forward.1} parent=1 // pred_fallthru
      _
    // Predicated region
    $region6: #{block_forward.1} parent=1 // pred_check
      _
    $region7: #{block_forward.1} parent=1 // pred_check_branch
      %15 = sbr.rel (0) target = $region9
    $region8: #{block_forward.1} parent=1 // pred_region
      _
    $region9: #{block_forward.1} parent=1 // pred_fallthru
      _
    // Predicated region
    $region10: #{block_forward.1} parent=1 // pred_check
      _
    $region11: #{block_forward.1} parent=1 // pred_check_branch
      %17 = sbr.rel (0) target = $region13
    $region12: #{block_forward.1} parent=1 // pred_region
      _
    $region13: #{block_forward.1} parent=1 // pred_fallthru
      _
    // Predicated region
    $region14: #{block_forward.1} parent=1 // pred_check
      _
    $region15: #{block_forward.1} parent=1 // pred_check_branch
      %19 = sbr.rel (0) target = $region17
    $region16: #{block_forward.1} parent=1 // pred_region
      _
    $region17: #{block_forward.1} parent=1 // pred_fallthru
      _
    // Predicated region
    $region18: #{block_forward.1} parent=1 // pred_check
      _
    $region19: #{block_forward.1} parent=1 // pred_check_branch
      %21 = sbr.rel (0) target = $region21
    $region20: #{block_forward.1} parent=1 // pred_region
      _
    $region21: #{block_forward.1} parent=1 // pred_fallthru
      _
    // Predicated region
    $region22: #{block_forward.1} parent=1 // pred_check
      _
    $region23: #{block_forward.1} parent=1 // pred_check_branch
      %23 = sbr.rel (0) target = $region25
    $region24: #{block_forward.1} parent=1 // pred_region
      _
    $region25: #{block_forward.1} parent=1 // pred_fallthru
      _
    %v25 = vld [vmem:[%s5] sm:$0x1]
    %v26 = vld [vmem:[%s5 + $0x1] sm:$0x1]
    %v27 = vld [vmem:[%s5 + $0x2] sm:$0x1]
    %v28 = vld [vmem:[%s5 + $0x3] sm:$0x1]
    %v29 = vld [vmem:[%s5 + $0x4] sm:$0x1]
    %v30 = vld [vmem:[%s5 + $0x5] sm:$0x1]
    %v31 = vld [vmem:[%s5 + $0x6] sm:$0x1]
    %v32 = vld [vmem:[%s1] sm:$0x3]
    %v33 = vpack.c.bf16 %v32, %v32
    %v34 = vld [vmem:[%s2] sm:$0xf]
    %v35 = vld [vmem:[%s2 + $0x4] sm:$0xf]
    %v36 = vld [vmem:[%s2 + $0x8] sm:$0xf]
    %v37 = vld [vmem:[%s2 + $0xc] sm:$0xf]
    %v38 = vlaneseq
    %v39 = vshrl.u32 %v38, 7
    %v40 = vsub.s32 0, %v39
    %v41 = vrot.slane %v25, %v40
    %v46 = vunpack.c.l.b16 %v34
    %v47 = vunpack.c.l.b16 %v35
    %v48 = vunpack.c.l.b16 %v36
    %v49 = vunpack.c.l.b16 %v37
    %v50 = vpack.c.b16 %v47, %v46
    %v51 = vpack.c.b16 %v49, %v48
    %vm54 = vcmask 261120
    %v56 = vsel %vm54, %v33, 0
    %58 = vmatprep.subr.bf16.mxu0 0
    %59 = vmatpush1.bf16.msra.mxu0 %v50
    %60 = vmatprep.subr.bf16.mxu0 0
    %61 = vmatpush1.bf16.msra.mxu0 %v51
    %62 = vmatprep.subr.bf16.mxu0 0
    %63 = vmatpush1.bf16.msra.mxu0 0
    %64 = vmatprep.subr.bf16.mxu0 0
    %65 = vmatpush1.bf16.msra.mxu0 0
    %66 = vmatprep.subr.bf16.mxu0 0
    %67 = vmatpush1.bf16.msra.mxu0 0
    %68 = vmatprep.subr.bf16.mxu0 0
    %69 = vmatpush1.bf16.msra.mxu0 0
    %70 = vmatprep.subr.bf16.mxu0 0
    %71 = vmatpush1.bf16.msra.mxu0 0
    %72 = vmatprep.subr.bf16.mxu0 0
    %73 = vmatpush1.bf16.msra.mxu0 0
    %74 = vmatprep.subr.bf16.mxu0 0
    %75 = vmatpush1.bf16.msra.mxu0 0
    %76 = vmatprep.subr.bf16.mxu0 0
    %77 = vmatpush1.bf16.msra.mxu0 0
    %78 = vmatprep.subr.bf16.mxu0 0
    %79 = vmatpush1.bf16.msra.mxu0 0
    %80 = vmatprep.subr.bf16.mxu0 0
    %81 = vmatpush1.bf16.msra.mxu0 0
    %82 = vmatprep.subr.bf16.mxu0 0
    %83 = vmatpush1.bf16.msra.mxu0 0
    %84 = vmatprep.subr.bf16.mxu0 0
    %85 = vmatpush1.bf16.msra.mxu0 0
    %86 = vmatprep.subr.bf16.mxu0 0
    %87 = vmatpush1.bf16.msra.mxu0 0
    %88 = vmatprep.subr.bf16.mxu0 0
    %89 = vmatpush1.bf16.msra.mxu0 0
    %90 = vmatprep.mubr.bf16.mxu0 0
    %91 = vmatmul.mubr.bf16.gmra.mrb[0].mxu0 %v56
    %v92 = vpop.f32.mrb[0].mxu0
    %v93 = vadd.f32 %v41, %v92
    %v94 = vpop.f32.mrb[0].mxu0
    %v95 = vpop.f32.mrb[0].mxu0
    %v96 = vpop.f32.mrb[0].mxu0
    %97 = vdwg.mxu0
    %v98 = vmin.f32 %v93, 20.0
    %v99 = vmul.f32 %v98, 1.442695
    %v100 = vpow.pop %v99
    %v101 = vadd.f32 %v100, 2.0
    %v102 = vmul.f32 %v100, %v101
    %v103 = vadd.f32 %v102, 2.0
    %v104 = vrcp.pop %v103
    %v105 = vmul.f32 %v102, %v104
    %vm106 = vcmp.gt.f32.partialorder %v93, 20.0
    %v107 = vmul.f32 %v93, %v105
    %v108 = vsel %vm106, %v93, %v107
    %v109 = vld [vmem:[%s0] sm:$0xf]
    %v110 = vld [vmem:[%s0 + $0x4] sm:$0x1]
    %v113 = vunpack.c.l.b16 %v109
    %v114 = vunpack.c.l.b16 %v110
    %v115 = vpack.c.b16 %v114, %v113
    %v117 = vshrl.u32 %v115, 16
    %v119 = vshll.u32 %v115, 16
    %v121 = vrot.slane %v119, 1
    %v122 = vor.u32 %v117, %v121
    %123 = vrot.lane.b32.xlu0 %v122, 64
    %v124 = vpop.permute.xlu0 %123
    %vm125 = vcmask 523264
    %v128 = vsel %vm125, %v109, %v124
    %s129 = scalar_lea.vmem %s0, 8
    %v130 = vld [vmem:[%s129] sm:$0xf]
    %v131 = vld [vmem:[%s129 + $0x4] sm:$0x1]
    %v134 = vunpack.c.l.b16 %v130
    %v135 = vunpack.c.l.b16 %v131
    %v136 = vpack.c.b16 %v135, %v134
    %v138 = vshrl.u32 %v136, 16
    %v140 = vshll.u32 %v136, 16
    %v142 = vrot.slane %v140, 1
    %v143 = vor.u32 %v138, %v142
    %144 = vrot.lane.b32.xlu0 %v143, 64
    %v145 = vpop.permute.xlu0 %144
    %v148 = vsel %vm125, %v130, %v145
    %v150 = vrot.slane %v148, 4
    %vm151 = vcmask 1043456
    %v153 = vsel %vm151, %v128, %v150
    %v155 = vld [vmem:[%s3] sm:$0xf]
    %v156 = vld [vmem:[%s3 + $0x4] sm:$0xf]
    %v157 = vld [vmem:[%s3 + $0x8] sm:$0xf]
    %v158 = vld [vmem:[%s3 + $0xc] sm:$0xf]
    %v159 = vld [vmem:[%s3 + $0x10] sm:$0xf]
    %v160 = vld [vmem:[%s3 + $0x14] sm:$0xf]
    %v161 = vld [vmem:[%s3 + $0x18] sm:$0xf]
    %v162 = vld [vmem:[%s3 + $0x1c] sm:$0xf]
    %v163 = vld [vmem:[%s3 + $0x20] sm:$0xf]
    %v164 = vld [vmem:[%s3 + $0x24] sm:$0xf]
    %v165 = vld [vmem:[%s3 + $0x28] sm:$0xf]
    %v166 = vld [vmem:[%s3 + $0x2c] sm:$0xf]
    %v167 = vld [vmem:[%s3 + $0x30] sm:$0xf]
    %v168 = vld [vmem:[%s3 + $0x34] sm:$0xf]
    %v169 = vld [vmem:[%s3 + $0x38] sm:$0xf]
    %v170 = vld [vmem:[%s3 + $0x3c] sm:$0xf]
    %v171 = vlaneseq
    %v172 = vshrl.u32 %v171, 7
    %v173 = vsub.s32 0, %v172
    %v174 = vrot.slane %v26, %v173
    %v191 = vunpack.c.l.b16 %v155
    %v192 = vunpack.c.l.b16 %v156
    %v193 = vunpack.c.l.b16 %v157
    %v194 = vunpack.c.l.b16 %v158
    %v195 = vunpack.c.l.b16 %v159
    %v196 = vunpack.c.l.b16 %v160
    %v197 = vunpack.c.l.b16 %v161
    %v198 = vunpack.c.l.b16 %v162
    %v199 = vunpack.c.l.b16 %v163
    %v200 = vunpack.c.l.b16 %v164
    %v201 = vunpack.c.l.b16 %v165
    %v202 = vunpack.c.l.b16 %v166
    %v203 = vunpack.c.l.b16 %v167
    %v204 = vunpack.c.l.b16 %v168
    %v205 = vunpack.c.l.b16 %v169
    %v206 = vunpack.c.l.b16 %v170
    %v207 = vpack.c.b16 %v192, %v191
    %v208 = vpack.c.b16 %v194, %v193
    %v209 = vpack.c.b16 %v196, %v195
    %v210 = vpack.c.b16 %v198, %v197
    %v211 = vpack.c.b16 %v200, %v199
    %v212 = vpack.c.b16 %v202, %v201
    %v213 = vpack.c.b16 %v204, %v203
    %v214 = vpack.c.b16 %v206, %v205
    %223 = vmatprep.subr.bf16.mxu0 0
    %224 = vmatpush1.bf16.msra.mxu0 %v207
    %225 = vmatprep.subr.bf16.mxu0 0
    %226 = vmatpush1.bf16.msra.mxu0 %v208
    %227 = vmatprep.subr.bf16.mxu0 0
    %228 = vmatpush1.bf16.msra.mxu0 %v209
    %229 = vmatprep.subr.bf16.mxu0 0
    %230 = vmatpush1.bf16.msra.mxu0 %v210
    %231 = vmatprep.subr.bf16.mxu0 0
    %232 = vmatpush1.bf16.msra.mxu0 %v211
    %233 = vmatprep.subr.bf16.mxu0 0
    %234 = vmatpush1.bf16.msra.mxu0 %v212
    %235 = vmatprep.subr.bf16.mxu0 0
    %236 = vmatpush1.bf16.msra.mxu0 %v213
    %237 = vmatprep.subr.bf16.mxu0 0
    %238 = vmatpush1.bf16.msra.mxu0 %v214
    %239 = vmatprep.subr.bf16.mxu0 0
    %240 = vmatpush1.bf16.msra.mxu0 0
    %241 = vmatprep.subr.bf16.mxu0 0
    %242 = vmatpush1.bf16.msra.mxu0 0
    %243 = vmatprep.subr.bf16.mxu0 0
    %244 = vmatpush1.bf16.msra.mxu0 0
    %245 = vmatprep.subr.bf16.mxu0 0
    %246 = vmatpush1.bf16.msra.mxu0 0
    %247 = vmatprep.subr.bf16.mxu0 0
    %248 = vmatpush1.bf16.msra.mxu0 0
    %249 = vmatprep.subr.bf16.mxu0 0
    %250 = vmatpush1.bf16.msra.mxu0 0
    %251 = vmatprep.subr.bf16.mxu0 0
    %252 = vmatpush1.bf16.msra.mxu0 0
    %253 = vmatprep.subr.bf16.mxu0 0
    %254 = vmatpush1.bf16.msra.mxu0 0
    %255 = vmatprep.mubr.bf16.mxu0 0
    %256 = vmatmul.mubr.bf16.gmra.mrb[0].mxu0 %v153
    %v257 = vpop.f32.mrb[0].mxu0
    %v258 = vadd.f32 %v174, %v257
    %v259 = vpop.f32.mrb[0].mxu0
    %v260 = vpop.f32.mrb[0].mxu0
    %v261 = vadd.f32 %v174, %v260
    %v262 = vpop.f32.mrb[0].mxu0
    %263 = vdwg.mxu0
    %v264 = vmin.f32 %v258, 20.0
    %v265 = vmin.f32 %v261, 20.0
    %v266 = vmul.f32 %v264, 1.442695
    %v267 = vpow.pop %v266
    %v268 = vmul.f32 %v265, 1.442695
    %v269 = vpow.pop %v268
    %v270 = vadd.f32 %v267, 2.0
    %v271 = vadd.f32 %v269, 2.0
    %v272 = vmul.f32 %v267, %v270
    %v273 = vmul.f32 %v269, %v271
    %v274 = vadd.f32 %v272, 2.0
    %v275 = vadd.f32 %v273, 2.0
    %v276 = vrcp.pop %v274
    %v277 = vrcp.pop %v275
    %v278 = vmul.f32 %v272, %v276
    %v279 = vmul.f32 %v273, %v277
    %vm280 = vcmp.gt.f32.partialorder %v258, 20.0
    %vm281 = vcmp.gt.f32.partialorder %v261, 20.0
    %v282 = vmul.f32 %v258, %v278
    %v283 = vmul.f32 %v261, %v279
    %v284 = vsel %vm280, %v258, %v282
    %v285 = vsel %vm281, %v261, %v283
    %v286 = vsel %vm125, %v284, 0.0
    %v287 = vsel %vm125, %v285, 0.0
    %v288 = vadd.f32 %v286, %v287
    %v289 = vrot.slane %v288, 4
    %v290 = vadd.f32 %v288, %v289
    %v291 = vrot.slane %v290, 2
    %v292 = vadd.f32 %v290, %v291
    %v293 = vrot.slane %v292, 1
    %v294 = vadd.f32 %v292, %v293
    %v295 = vrcp.pop 16.0
    %v296 = vmul.f32 %v294, %v295
    %v297 = vsub.f32 %v284, %v296
    %v298 = vsub.f32 %v285, %v296
    %v299 = vmul.f32 %v297, %v297
    %v300 = vmul.f32 %v298, %v298
    %v301 = vsel %vm125, %v299, 0.0
    %v302 = vsel %vm125, %v300, 0.0
    %v303 = vadd.f32 %v301, %v302
    %v304 = vrot.slane %v303, 4
    %v305 = vadd.f32 %v303, %v304
    %v306 = vrot.slane %v305, 2
    %v307 = vadd.f32 %v305, %v306
    %v308 = vrot.slane %v307, 1
    %v309 = vadd.f32 %v307, %v308
    %v310 = vmul.f32 %v309, %v295
    %v311 = vadd.f32 %v310, 1e-05
    %v312 = vrsqrt.pop %v311
    %v313 = vmul.f32 %v27, %v312
    %v314 = vmul.f32 %v296, %v313
    %v315 = vsub.f32 %v28, %v314
    %vm316 = vcmask 516096
    %vm317 = vsmask.f32 256
    %vm318 = vmand %vm316, %vm317
    %v319 = vld [vmem:[#allocation2] sm:$0x1]
    %v320 = vsel %vm318, 0, %v319
    %321 = vst [vmem:[#allocation2] sm:$0x1] %v320
    %v322 = vld [vmem:[#allocation2 + $0x8] sm:$0x1]
    %v323 = vsel %vm318, 0, %v322
    %324 = vst [vmem:[#allocation2 + $0x8] sm:$0x1] %v323
    %vm325 = vsmask.f32 7938
    %vm326 = vmand %vm316, %vm325
    %v327 = vld [vmem:[#allocation2 + $0x4] sm:$0x1]
    %v328 = vsel %vm326, 0, %v327
    %329 = vst [vmem:[#allocation2 + $0x4] sm:$0x1] %v328
    %v330 = vld [vmem:[#allocation2 + $0xc] sm:$0x1]
    %v331 = vsel %vm326, 0, %v330
    %332 = vst [vmem:[#allocation2 + $0xc] sm:$0x1] %v331
    %v333 = vlaneseq
    %v334 = vshrl.u32 %v333, 7
    %v335 = vsub.s32 0, %v334
    %v336 = vrot.slane %v313, %v335
    %v337 = vmul.f32 %v284, %v336
    %v338 = vadd.f32 %v315, %v108
    %v339 = vlaneseq
    %v340 = vshrl.u32 %v339, 7
    %v341 = vsub.s32 0, %v340
    %v342 = vrot.slane %v338, %v341
    %v343 = vadd.f32 %v337, %v342
    %v344 = vpack.c.bf16 %v343, %v343
    %v346 = vunpack.c.l.b16 %v344
    %v347 = vpack.c.b16 %v346, %v346
    %v349 = vshrl.u32 %v347, 16
    %v351 = vrot.slane %v349, 7
    %v352 = vshll.u32 %v347, 16
    %v354 = vor.u32 %v351, %v352
    %v355 = vrot.slane %v351, 4
    %vm358 = vcmask 519168
    %vm359 = vmand %vm358, %vm325
    %v360 = vld [vmem:[#allocation2] sm:$0xf]
    %v361 = vsel %vm359, %v354, %v360
    %362 = vst [vmem:[#allocation2] sm:$0xf] %v361
    %v363 = vld [vmem:[#allocation2 + $0x4] sm:$0x1]
    %v364 = vsel %vm318, %v355, %v363
    %365 = vst [vmem:[#allocation2 + $0x4] sm:$0x1] %v364
    %v366 = vmul.f32 %v285, %v336
    %v368 = vrot.slane %v108, 1
    %v370 = vadd.f32 %v315, %v368
    %v371 = vlaneseq
    %v372 = vshrl.u32 %v371, 7
    %v373 = vsub.s32 0, %v372
    %v374 = vrot.slane %v370, %v373
    %v375 = vadd.f32 %v366, %v374
    %v376 = vpack.c.bf16 %v375, %v375
    %v378 = vunpack.c.l.b16 %v376
    %v379 = vpack.c.b16 %v378, %v378
    %v381 = vshrl.u32 %v379, 16
    %v383 = vrot.slane %v381, 7
    %v384 = vshll.u32 %v379, 16
    %v386 = vor.u32 %v383, %v384
    %v387 = vrot.slane %v383, 4
    %s390 = scalar_lea.vmem [#allocation2], 8
    %v391 = vld [vmem:[%s390] sm:$0xf]
    %v392 = vsel %vm359, %v386, %v391
    %393 = vst [vmem:[%s390] sm:$0xf] %v392
    %v394 = vld [vmem:[%s390 + $0x4] sm:$0x1]
    %v395 = vsel %vm318, %v387, %v394
    %396 = vst [vmem:[%s390 + $0x4] sm:$0x1] %v395
    %v397 = vld [vmem:[#allocation2] sm:$0xf]
    %v398 = vld [vmem:[#allocation2 + $0x4] sm:$0x1]
    %v399 = vld [vmem:[#allocation2] sm:$0xe]
    %v402 = vunpack.c.l.b16 %v397
    %v403 = vunpack.c.l.b16 %v398
    %v404 = vpack.c.b16 %v403, %v402
    %v406 = vshrl.u32 %v404, 16
    %v408 = vshll.u32 %v404, 16
    %v410 = vrot.slane %v408, 1
    %v411 = vor.u32 %v406, %v410
    %412 = vrot.lane.b32.xlu0 %v411, 64
    %v413 = vpop.permute.xlu0 %412
    %v415 = vunpack.c.l.b16 %v399
    %v416 = vpack.c.b16 %v403, %v415
    %v417 = vrot.slane %v416, 1
    %v420 = vsel %vm125, %v397, %v413
    %v421 = vld [vmem:[%s390] sm:$0xf]
    %v422 = vld [vmem:[%s390 + $0x4] sm:$0x1]
    %v423 = vld [vmem:[%s390] sm:$0xe]
    %v426 = vunpack.c.l.b16 %v421
    %v427 = vunpack.c.l.b16 %v422
    %v428 = vpack.c.b16 %v427, %v426
    %v430 = vshrl.u32 %v428, 16
    %v432 = vshll.u32 %v428, 16
    %v434 = vrot.slane %v432, 1
    %v435 = vor.u32 %v430, %v434
    %436 = vrot.lane.b32.xlu0 %v435, 64
    %v437 = vpop.permute.xlu0 %436
    %v439 = vunpack.c.l.b16 %v423
    %v440 = vpack.c.b16 %v427, %v439
    %v441 = vrot.slane %v440, 1
    %v444 = vsel %vm125, %v421, %v437
    %v446 = vrot.slane %v444, 4
    %v447 = vrot.slane %v441, 4
    %v449 = vsel %vm151, %v420, %v446
    %v453 = vsel %vm151, %v417, %v447
    %v454 = vld [vmem:[%s4] sm:$0xf]
    %v455 = vld [vmem:[%s4 + $0x4] sm:$0xf]
    %v456 = vld [vmem:[%s4 + $0x8] sm:$0xf]
    %v457 = vld [vmem:[%s4 + $0xc] sm:$0xf]
    %v458 = vld [vmem:[%s4 + $0x10] sm:$0xf]
    %v459 = vld [vmem:[%s4 + $0x14] sm:$0xf]
    %v460 = vld [vmem:[%s4 + $0x18] sm:$0xf]
    %v461 = vld [vmem:[%s4 + $0x1c] sm:$0xf]
    %v462 = vld [vmem:[%s4 + $0x20] sm:$0xf]
    %v463 = vld [vmem:[%s4 + $0x24] sm:$0xf]
    %v464 = vld [vmem:[%s4 + $0x28] sm:$0xf]
    %v465 = vld [vmem:[%s4 + $0x2c] sm:$0xf]
    %v466 = vld [vmem:[%s4 + $0x30] sm:$0xf]
    %v467 = vld [vmem:[%s4 + $0x34] sm:$0xf]
    %v468 = vld [vmem:[%s4 + $0x38] sm:$0xf]
    %v469 = vld [vmem:[%s4 + $0x3c] sm:$0xf]
    %v470 = vld [vmem:[%s4 + $0x40] sm:$0xf]
    %v471 = vld [vmem:[%s4 + $0x44] sm:$0xf]
    %v472 = vld [vmem:[%s4 + $0x48] sm:$0xf]
    %v473 = vld [vmem:[%s4 + $0x4c] sm:$0xf]
    %v474 = vld [vmem:[%s4 + $0x50] sm:$0xf]
    %v475 = vld [vmem:[%s4 + $0x54] sm:$0xf]
    %v476 = vld [vmem:[%s4 + $0x58] sm:$0xf]
    %v477 = vld [vmem:[%s4 + $0x5c] sm:$0xf]
    %v478 = vlaneseq
    %v479 = vshrl.u32 %v478, 7
    %v480 = vsub.s32 0, %v479
    %v481 = vrot.slane %v29, %v480
    %v506 = vunpack.c.l.b16 %v454
    %v507 = vunpack.c.l.b16 %v455
    %v508 = vunpack.c.l.b16 %v456
    %v509 = vunpack.c.l.b16 %v457
    %v510 = vunpack.c.l.b16 %v458
    %v511 = vunpack.c.l.b16 %v459
    %v512 = vunpack.c.l.b16 %v460
    %v513 = vunpack.c.l.b16 %v461
    %v514 = vunpack.c.l.b16 %v462
    %v515 = vunpack.c.l.b16 %v463
    %v516 = vunpack.c.l.b16 %v464
    %v517 = vunpack.c.l.b16 %v465
    %v518 = vunpack.c.l.b16 %v466
    %v519 = vunpack.c.l.b16 %v467
    %v520 = vunpack.c.l.b16 %v468
    %v521 = vunpack.c.l.b16 %v469
    %v522 = vunpack.c.l.b16 %v470
    %v523 = vunpack.c.l.b16 %v471
    %v524 = vunpack.c.l.b16 %v472
    %v525 = vunpack.c.l.b16 %v473
    %v526 = vunpack.c.l.b16 %v474
    %v527 = vunpack.c.l.b16 %v475
    %v528 = vunpack.c.l.b16 %v476
    %v529 = vunpack.c.l.b16 %v477
    %v530 = vpack.c.b16 %v507, %v506
    %v531 = vpack.c.b16 %v509, %v508
    %v532 = vpack.c.b16 %v511, %v510
    %v533 = vpack.c.b16 %v513, %v512
    %v534 = vpack.c.b16 %v515, %v514
    %v535 = vpack.c.b16 %v517, %v516
    %v536 = vpack.c.b16 %v519, %v518
    %v537 = vpack.c.b16 %v521, %v520
    %v538 = vpack.c.b16 %v523, %v522
    %v539 = vpack.c.b16 %v525, %v524
    %v540 = vpack.c.b16 %v527, %v526
    %v541 = vpack.c.b16 %v529, %v528
    %v554 = vsel %vm125, %v453, 0
    %556 = vmatprep.subr.bf16.mxu0 0
    %557 = vmatpush1.bf16.msra.mxu0 %v530
    %558 = vmatprep.subr.bf16.mxu0 0
    %559 = vmatpush1.bf16.msra.mxu0 %v531
    %560 = vmatprep.subr.bf16.mxu0 0
    %561 = vmatpush1.bf16.msra.mxu0 %v532
    %562 = vmatprep.subr.bf16.mxu0 0
    %563 = vmatpush1.bf16.msra.mxu0 %v533
    %564 = vmatprep.subr.bf16.mxu0 0
    %565 = vmatpush1.bf16.msra.mxu0 %v534
    %566 = vmatprep.subr.bf16.mxu0 0
    %567 = vmatpush1.bf16.msra.mxu0 %v535
    %568 = vmatprep.subr.bf16.mxu0 0
    %569 = vmatpush1.bf16.msra.mxu0 %v536
    %570 = vmatprep.subr.bf16.mxu0 0
    %571 = vmatpush1.bf16.msra.mxu0 %v537
    %572 = vmatprep.subr.bf16.mxu0 0
    %573 = vmatpush1.bf16.msra.mxu0 %v538
    %574 = vmatprep.subr.bf16.mxu0 0
    %575 = vmatpush1.bf16.msra.mxu0 %v539
    %576 = vmatprep.subr.bf16.mxu0 0
    %577 = vmatpush1.bf16.msra.mxu0 %v540
    %578 = vmatprep.subr.bf16.mxu0 0
    %579 = vmatpush1.bf16.msra.mxu0 %v541
    %580 = vmatprep.subr.bf16.mxu0 0
    %581 = vmatpush1.bf16.msra.mxu0 0
    %582 = vmatprep.subr.bf16.mxu0 0
    %583 = vmatpush1.bf16.msra.mxu0 0
    %584 = vmatprep.subr.bf16.mxu0 0
    %585 = vmatpush1.bf16.msra.mxu0 0
    %586 = vmatprep.subr.bf16.mxu0 0
    %587 = vmatpush1.bf16.msra.mxu0 0
    %588 = vmatprep.mubr.bf16.mxu0 %v554
    %589 = vmatmul.mubr.bf16.gmra.mrb[0].mxu0 %v449
    %v590 = vpop.f32.mrb[0].mxu0
    %v591 = vadd.f32 %v481, %v590
    %v592 = vpop.f32.mrb[0].mxu0
    %v593 = vpop.f32.mrb[0].mxu0
    %v594 = vadd.f32 %v481, %v593
    %v595 = vpop.f32.mrb[0].mxu0
    %596 = vdwg.mxu0
    %v597 = vmin.f32 %v591, 20.0
    %v598 = vmin.f32 %v594, 20.0
    %v599 = vmul.f32 %v597, 1.442695
    %v600 = vpow.pop %v599
    %v601 = vmul.f32 %v598, 1.442695
    %v602 = vpow.pop %v601
    %v603 = vadd.f32 %v600, 2.0
    %v604 = vadd.f32 %v602, 2.0
    %v605 = vmul.f32 %v600, %v603
    %v606 = vmul.f32 %v602, %v604
    %v607 = vadd.f32 %v605, 2.0
    %v608 = vadd.f32 %v606, 2.0
    %v609 = vrcp.pop %v607
    %v610 = vrcp.pop %v608
    %v611 = vmul.f32 %v605, %v609
    %v612 = vmul.f32 %v606, %v610
    %vm613 = vcmp.gt.f32.partialorder %v591, 20.0
    %vm614 = vcmp.gt.f32.partialorder %v594, 20.0
    %v615 = vmul.f32 %v591, %v611
    %v616 = vmul.f32 %v594, %v612
    %v617 = vsel %vm613, %v591, %v615
    %v618 = vsel %vm614, %v594, %v616
    %v619 = vsel %vm125, %v617, 0.0
    %v620 = vsel %vm125, %v618, 0.0
    %v621 = vadd.f32 %v619, %v620
    %v622 = vrot.slane %v621, 4
    %v623 = vadd.f32 %v621, %v622
    %v624 = vrot.slane %v623, 2
    %v625 = vadd.f32 %v623, %v624
    %v626 = vrot.slane %v625, 1
    %v627 = vadd.f32 %v625, %v626
    %v628 = vmul.f32 %v627, %v295
    %v629 = vsub.f32 %v617, %v628
    %v630 = vsub.f32 %v618, %v628
    %v631 = vmul.f32 %v629, %v629
    %v632 = vmul.f32 %v630, %v630
    %v633 = vsel %vm125, %v631, 0.0
    %v634 = vsel %vm125, %v632, 0.0
    %v635 = vadd.f32 %v633, %v634
    %v636 = vrot.slane %v635, 4
    %v637 = vadd.f32 %v635, %v636
    %v638 = vrot.slane %v637, 2
    %v639 = vadd.f32 %v637, %v638
    %v640 = vrot.slane %v639, 1
    %v641 = vadd.f32 %v639, %v640
    %v642 = vmul.f32 %v641, %v295
    %v643 = vadd.f32 %v642, 1e-05
    %v644 = vrsqrt.pop %v643
    %v645 = vmul.f32 %v30, %v644
    %v646 = vlaneseq
    %v647 = vshrl.u32 %v646, 7
    %v648 = vsub.s32 0, %v647
    %v649 = vrot.slane %v645, %v648
    %v650 = vmul.f32 %v617, %v649
    %v651 = vmul.f32 %v618, %v649
    %v652 = vmul.f32 %v628, %v645
    %v653 = vsub.f32 %v31, %v652
    %v654 = vlaneseq
    %v655 = vshrl.u32 %v654, 7
    %v656 = vsub.s32 0, %v655
    %v657 = vrot.slane %v653, %v656
    %v658 = vadd.f32 %v650, %v657
    %v659 = vadd.f32 %v651, %v657
    %660 = vst.msk [vmem:[#allocation3] sm:$0xff] %vm125, %v658
    %661 = vst.msk [vmem:[#allocation3 + $0x8] sm:$0xff] %vm125, %v659
    // Predicated region
    $region26: #{block_forward.1} parent=1 // pred_check
      _
    $region27: #{block_forward.1} parent=1 // pred_check_branch
      %663 = sbr.rel (0) target = $region29
    $region28: #{block_forward.1} parent=1 // pred_region
      %s665 = ssub.s32 256, 256
      %666 = vsyncadd [#allocation4], %s665
      %s667 = sshll.u32 [#allocation3], 4
      %s668 = int_to_ptr.vmem [resolvable:$true] %s667
      %673 = dma.vmem_to_hbm [thread:$0]  %s668, 256, %s6, [#allocation4], 128, 128, 8
    $region29: #{block_forward.1} parent=1 // pred_fallthru
      _
    // Predicated region
    $region30: #{block_forward.1} parent=1 // pred_check
      _
    $region31: #{block_forward.1} parent=1 // pred_check_branch
      %675 = sbr.rel (0) target = $region33
    $region32: #{block_forward.1} parent=1 // pred_region
      %676 = dma.done [#allocation4], 256
    $region33: #{block_forward.1} parent=1 // pred_fallthru
      _
    %677 = vsyncpa [#allocation4], 1

</llo_original>
